<compile_context>
chip_gen: v7x
topology: tpu7x:2x2x1
jax: 0.10.0
libtpu: 0.0.40
codegen_flags: <defaults>
</compile_context>

<pallas_src>
import functools

import jax
import jax.numpy as jnp
from jax.experimental import pallas as pl
from jax.experimental.pallas import tpu as pltpu

_NEG_BIG = -1e30  # bias for padded vocab columns (exp underflows to exactly 0)


def _cdiv(a, b):
    return -(-a // b)


def _round_up(a, b):
    return _cdiv(a, b) * b


def _generator_kernel(x_ref, w_ref, b_ref, out_ref, lse_ref, m_sc, l_sc, *, fused):
    # x_ref: (tm, H)   w_ref: (to, H)  native (out, in) layout
    # b_ref: (1, to)   out_ref: (tm, to)   lse_ref: (tm, 1)
    # m_sc/l_sc: (tm, 1) running max / running sum-of-exp across O tiles
    j = pl.program_id(1)

    @pl.when(j == 0)
    def _():
        m_sc[...] = jnp.full_like(m_sc, -jnp.inf)
        l_sc[...] = jnp.zeros_like(l_sc)

    # x @ W^T on the MXU with f32 accumulation; weight stays (O, H).
    logits = jax.lax.dot_general(
        x_ref[...], w_ref[...],
        dimension_numbers=(((1,), (1,)), ((), ())),
        preferred_element_type=jnp.float32,
    ) + b_ref[...]

    # online logsumexp across the vocab grid axis
    m_prev = m_sc[...]
    l_prev = l_sc[...]
    m_new = jnp.maximum(m_prev, jnp.max(logits, axis=-1, keepdims=True))
    l_new = l_prev * jnp.exp(m_prev - m_new) + jnp.sum(
        jnp.exp(logits - m_new), axis=-1, keepdims=True)
    m_sc[...] = m_new
    l_sc[...] = l_new

    if fused:
        # whole (padded) vocab is in this tile: write normalized log-probs now
        out_ref[...] = (logits - (m_new + jnp.log(l_new))).astype(out_ref.dtype)
    else:
        # multi-tile vocab: stash raw logits, wrapper subtracts lse afterwards
        out_ref[...] = logits.astype(out_ref.dtype)

    @pl.when(j == pl.num_programs(1) - 1)
    def _():
        lse_ref[...] = m_sc[...] + jnp.log(l_sc[...])


def generator_forward(x, weight, bias, *, tm=512, o_tile=1024,
                      compute_dtype=jnp.bfloat16):
    """log_softmax(x @ weight.T + bias, axis=-1).

    x: [..., H] float; weight: [O, H] (PyTorch nn.Linear layout); bias: [O].
    Returns [..., O] float32.
    """
    *lead, H = x.shape
    O = weight.shape[0]
    M = 1
    for d in lead:
        M *= d

    # ---- tile sizing -------------------------------------------------------
    n_m = _cdiv(M, max(8, _round_up(tm, 8)))
    tm = _round_up(_cdiv(M, n_m), 8)          # balanced, multiple of 8 sublanes
    M_pad = tm * n_m

    O128 = _round_up(O, 128)
    to_max = max(128, _round_up(o_tile, 128))
    n_o = _cdiv(O128, to_max)
    to = _round_up(_cdiv(O128, n_o), 128)     # balanced, multiple of 128 lanes
    O_pad = to * n_o
    fused = n_o == 1

    # ---- pad / cast operands (no-ops when already aligned) -----------------
    x2 = x.reshape(M, H)
    if M_pad != M:
        x2 = jnp.pad(x2, ((0, M_pad - M), (0, 0)))
    x2 = x2.astype(compute_dtype)

    w = weight
    if O_pad != O:
        w = jnp.pad(w, ((0, O_pad - O), (0, 0)))
    w = w.astype(compute_dtype)

    b = bias.astype(jnp.float32)
    if O_pad != O:
        b = jnp.pad(b, (0, O_pad - O), constant_values=_NEG_BIG)
    b = b.reshape(1, O_pad)

    # ---- VMEM budget: double-buffered blocks + scratch, capped for v7x -----
    csz = jnp.dtype(compute_dtype).itemsize
    block_bytes = (tm * H * csz + to * H * csz + to * 4 + tm * to * 4 + tm * 4)
    vmem_limit = int(min(64 * 2 ** 20,
                         max(16 * 2 ** 20, 2 * (2 * block_bytes + 2 * tm * 4))))

    out, lse = pl.pallas_call(
        functools.partial(_generator_kernel, fused=fused),
        out_shape=(jax.ShapeDtypeStruct((M_pad, O_pad), jnp.float32),
                   jax.ShapeDtypeStruct((M_pad, 1), jnp.float32)),
        grid_spec=pltpu.PrefetchScalarGridSpec(
            num_scalar_prefetch=0,
            grid=(M_pad // tm, n_o),
            in_specs=[
                pl.BlockSpec((tm, H), lambda i, j: (i, 0)),    # activations
                pl.BlockSpec((to, H), lambda i, j: (j, 0)),    # weight (O, H)
                pl.BlockSpec((1, to), lambda i, j: (0, j)),    # bias
            ],
            out_specs=[
                pl.BlockSpec((tm, to), lambda i, j: (i, j)),   # logits/logprobs
                pl.BlockSpec((tm, 1), lambda i, j: (i, 0)),    # row logsumexp
            ],
            scratch_shapes=[
                pltpu.VMEM((tm, 1), jnp.float32),  # running max
                pltpu.VMEM((tm, 1), jnp.float32),  # running sum-of-exp
            ],
        ),
        compiler_params=pltpu.CompilerParams(
            dimension_semantics=("parallel", "arbitrary"),
            vmem_limit_bytes=vmem_limit,
        ),
    )(x2, w, b)

    if not fused:
        out = out - lse            # normalize; XLA fuses this broadcast subtract

    out = out[:M, :O]
    return out.reshape(*lead, O)


if __name__ == "__main__":
    def reference(x, weight, bias):
        logits = jnp.einsum("...h,oh->...o", x, weight,
                            precision=jax.lax.Precision.HIGHEST) + bias
        return jax.nn.log_softmax(logits, axis=-1)

    key = jax.random.PRNGKey(0)

    # --- case 1: Generator toy shapes (hidden=32, output=64, batch=2, seq=8)
    B, S, H, O = 2, 8, 32, 64
    k1, k2, k3, key = jax.random.split(key, 4)
    bound = 1.0 / (H ** 0.5)
    weight = jax.random.uniform(k2, (O, H), jnp.float32, -bound, bound)
    bias = jax.random.uniform(k3, (O,), jnp.float32, -bound, bound)
    x = jax.random.normal(k1, (B, S, H), jnp.float32)
    ref = reference(x, weight, bias)

    y32 = jax.block_until_ready(
        generator_forward(x, weight, bias, compute_dtype=jnp.float32))
    assert y32.shape == (B, S, O)
    assert jnp.allclose(y32, ref, atol=2e-2, rtol=2e-2), \
        float(jnp.max(jnp.abs(y32 - ref)))

    ybf = jax.block_until_ready(generator_forward(x, weight, bias))  # bf16 ops
    assert ybf.shape == (B, S, O)
    assert jnp.allclose(ybf, ref, atol=5e-2, rtol=5e-2), \
        float(jnp.max(jnp.abs(ybf - ref)))

    # --- case 2: exercise the O-tiled online-logsumexp path + M/O padding
    B2, S2, H2, O2 = 3, 5, 32, 200
    k1, k2, k3, key = jax.random.split(key, 4)
    bound2 = 1.0 / (H2 ** 0.5)
    weight2 = jax.random.uniform(k2, (O2, H2), jnp.float32, -bound2, bound2)
    bias2 = jax.random.uniform(k3, (O2,), jnp.float32, -bound2, bound2)
    x2 = jax.random.normal(k1, (B2, S2, H2), jnp.float32)
    ref2 = reference(x2, weight2, bias2)

    y2 = jax.block_until_ready(
        generator_forward(x2, weight2, bias2, o_tile=128,
                          compute_dtype=jnp.float32))
    assert y2.shape == (B2, S2, O2)
    assert jnp.allclose(y2, ref2, atol=2e-2, rtol=2e-2), \
        float(jnp.max(jnp.abs(y2 - ref2)))

    print("KERNEL_OK")
</pallas_src>

<mosaic_0001>
module attributes {stable_mosaic.version = 11 : i64} {
  func.func @_generator_kernel(%arg0: i32, %arg1: i32, %arg2: memref<16x32xf32, #tpu.memory_space<vmem>>, %arg3: memref<128x32xf32, #tpu.memory_space<vmem>>, %arg4: memref<1x128xf32, #tpu.memory_space<vmem>>, %arg5: memref<16x128xf32, #tpu.memory_space<vmem>>, %arg6: memref<16x1xf32, #tpu.memory_space<vmem>>, %arg7: memref<16x1xf32, #tpu.memory_space<vmem>>, %arg8: memref<16x1xf32, #tpu.memory_space<vmem>>) attributes {dimension_semantics = [#tpu.dimension_semantics<parallel>, #tpu.dimension_semantics<arbitrary>], iteration_bounds = array<i64: 1, 1>, scalar_prefetch = 0 : i64, scratch_operands = 2 : i64, tpu.core_type = #tpu.core_type<tc>, window_params = [{transform_indices = @transform_0, window_bounds = array<i64: 16, 32>}, {transform_indices = @transform_1, window_bounds = array<i64: 128, 32>}, {transform_indices = @transform_2, window_bounds = array<i64: 1, 128>}, {transform_indices = @transform_3, window_bounds = array<i64: 16, 128>}, {transform_indices = @transform_4, window_bounds = array<i64: 16, 1>}]} {
    %c0_i32 = arith.constant 0 : i32
    %0 = arith.cmpi eq, %arg1, %c0_i32 : i32
    %1 = arith.extui %0 : i1 to i32
    %c0_i32_0 = arith.constant 0 : i32
    %2 = arith.cmpi ne, %1, %c0_i32_0 : i32
    scf.if %2 {
      %cst_20 = arith.constant 0xFF800000 : f32
      %33 = vector.broadcast %cst_20 : f32 to vector<16x1xf32>
      %c0_21 = arith.constant 0 : index
      %c0_22 = arith.constant 0 : index
      %34 = vector.load %arg7[%c0_21, %c0_22] : memref<16x1xf32, #tpu.memory_space<vmem>>, vector<16x1xf32>
      tpu.vector_store %arg7[%c0_21, %c0_22], %33 {strides = array<i32>} : memref<16x1xf32, #tpu.memory_space<vmem>>, vector<16x1xf32>,
      %cst_23 = arith.constant 0.000000e+00 : f32
      %35 = vector.broadcast %cst_23 : f32 to vector<16x1xf32>
      %c0_24 = arith.constant 0 : index
      %c0_25 = arith.constant 0 : index
      %36 = vector.load %arg8[%c0_24, %c0_25] : memref<16x1xf32, #tpu.memory_space<vmem>>, vector<16x1xf32>
      tpu.vector_store %arg8[%c0_24, %c0_25], %35 {strides = array<i32>} : memref<16x1xf32, #tpu.memory_space<vmem>>, vector<16x1xf32>,
    } else {
    }
    %c0 = arith.constant 0 : index
    %c0_1 = arith.constant 0 : index
    %3 = vector.load %arg2[%c0, %c0_1] : memref<16x32xf32, #tpu.memory_space<vmem>>, vector<16x32xf32>
    %c0_2 = arith.constant 0 : index
    %c0_3 = arith.constant 0 : index
    %4 = vector.load %arg3[%c0_2, %c0_3] : memref<128x32xf32, #tpu.memory_space<vmem>>, vector<128x32xf32>
    %cst = arith.constant dense<0.000000e+00> : vector<16x128xf32>
    %5 = tpu.matmul %3, %4, %cst {dimension_numbers = #tpu.dot_dimension_numbers<[1], [1], [0], [0], [0, 0, 1, 0], [], []>} : vector<16x32xf32>, vector<128x32xf32>, vector<16x128xf32> -> vector<16x128xf32>
    %c0_4 = arith.constant 0 : index
    %c0_5 = arith.constant 0 : index
    %6 = vector.load %arg4[%c0_4, %c0_5] : memref<1x128xf32, #tpu.memory_space<vmem>>, vector<1x128xf32>
    %7 = vector.broadcast %6 : vector<1x128xf32> to vector<16x128xf32>
    %8 = arith.addf %5, %7 : vector<16x128xf32>
    %c0_6 = arith.constant 0 : index
    %c0_7 = arith.constant 0 : index
    %9 = vector.load %arg7[%c0_6, %c0_7] : memref<16x1xf32, #tpu.memory_space<vmem>>, vector<16x1xf32>
    %c0_8 = arith.constant 0 : index
    %c0_9 = arith.constant 0 : index
    %10 = vector.load %arg8[%c0_8, %c0_9] : memref<16x1xf32, #tpu.memory_space<vmem>>, vector<16x1xf32>
    %cst_10 = arith.constant dense<0xFF800000> : vector<16xf32>
    %11 = vector.multi_reduction <maximumf>, %8, %cst_10 [1] : vector<16x128xf32> to vector<16xf32>
    %12 = vector.shape_cast %11 : vector<16xf32> to vector<16x1xf32>
    %13 = arith.maximumf %9, %12 : vector<16x1xf32>
    %14 = arith.subf %9, %13 : vector<16x1xf32>
    %15 = math.exp %14 : vector<16x1xf32>
    %16 = arith.mulf %10, %15 : vector<16x1xf32>
    %17 = vector.broadcast %13 : vector<16x1xf32> to vector<16x128xf32>
    %18 = arith.subf %8, %17 : vector<16x128xf32>
    %19 = math.exp %18 : vector<16x128xf32>
    %cst_11 = arith.constant dense<0.000000e+00> : vector<16xf32>
    %20 = vector.multi_reduction <add>, %19, %cst_11 [1] : vector<16x128xf32> to vector<16xf32>
    %21 = vector.shape_cast %20 : vector<16xf32> to vector<16x1xf32>
    %22 = arith.addf %16, %21 : vector<16x1xf32>
    %c0_12 = arith.constant 0 : index
    %c0_13 = arith.constant 0 : index
    %23 = vector.load %arg7[%c0_12, %c0_13] : memref<16x1xf32, #tpu.memory_space<vmem>>, vector<16x1xf32>
    tpu.vector_store %arg7[%c0_12, %c0_13], %13 {strides = array<i32>} : memref<16x1xf32, #tpu.memory_space<vmem>>, vector<16x1xf32>,
    %c0_14 = arith.constant 0 : index
    %c0_15 = arith.constant 0 : index
    %24 = vector.load %arg8[%c0_14, %c0_15] : memref<16x1xf32, #tpu.memory_space<vmem>>, vector<16x1xf32>
    tpu.vector_store %arg8[%c0_14, %c0_15], %22 {strides = array<i32>} : memref<16x1xf32, #tpu.memory_space<vmem>>, vector<16x1xf32>,
    %25 = math.log %22 : vector<16x1xf32>
    %26 = arith.addf %13, %25 : vector<16x1xf32>
    %27 = vector.broadcast %26 : vector<16x1xf32> to vector<16x128xf32>
    %28 = arith.subf %8, %27 : vector<16x128xf32>
    %c0_16 = arith.constant 0 : index
    %c0_17 = arith.constant 0 : index
    %29 = vector.load %arg5[%c0_16, %c0_17] : memref<16x128xf32, #tpu.memory_space<vmem>>, vector<16x128xf32>
    tpu.vector_store %arg5[%c0_16, %c0_17], %28 {strides = array<i32>} : memref<16x128xf32, #tpu.memory_space<vmem>>, vector<16x128xf32>,
    %c0_i32_18 = arith.constant 0 : i32
    %30 = arith.cmpi eq, %arg1, %c0_i32_18 : i32
    %31 = arith.extui %30 : i1 to i32
    %c0_i32_19 = arith.constant 0 : i32
    %32 = arith.cmpi ne, %31, %c0_i32_19 : i32
    scf.if %32 {
      %c0_20 = arith.constant 0 : index
      %c0_21 = arith.constant 0 : index
      %33 = vector.load %arg7[%c0_20, %c0_21] : memref<16x1xf32, #tpu.memory_space<vmem>>, vector<16x1xf32>
      %c0_22 = arith.constant 0 : index
      %c0_23 = arith.constant 0 : index
      %34 = vector.load %arg8[%c0_22, %c0_23] : memref<16x1xf32, #tpu.memory_space<vmem>>, vector<16x1xf32>
      %35 = math.log %34 : vector<16x1xf32>
      %36 = arith.addf %33, %35 : vector<16x1xf32>
      %c0_24 = arith.constant 0 : index
      %c0_25 = arith.constant 0 : index
      %37 = vector.load %arg6[%c0_24, %c0_25] : memref<16x1xf32, #tpu.memory_space<vmem>>, vector<16x1xf32>
      tpu.vector_store %arg6[%c0_24, %c0_25], %36 {strides = array<i32>} : memref<16x1xf32, #tpu.memory_space<vmem>>, vector<16x1xf32>,
    } else {
    }
    return
  }
  func.func @transform_0(%arg0: i32, %arg1: i32) -> (i32, i32) {
    %c0_i32 = arith.constant 0 : i32
    %c0_i32_0 = arith.constant 0 : i32
    return %arg0, %c0_i32 : i32, i32
  }
  func.func @transform_1(%arg0: i32, %arg1: i32) -> (i32, i32) {
    %c0_i32 = arith.constant 0 : i32
    %c0_i32_0 = arith.constant 0 : i32
    return %arg1, %c0_i32 : i32, i32
  }
  func.func @transform_2(%arg0: i32, %arg1: i32) -> (i32, i32) {
    %c0_i32 = arith.constant 0 : i32
    %c0_i32_0 = arith.constant 0 : i32
    return %c0_i32, %arg1 : i32, i32
  }
  func.func @transform_3(%arg0: i32, %arg1: i32) -> (i32, i32) {
    %c0_i32 = arith.constant 0 : i32
    return %arg0, %arg1 : i32, i32
  }
  func.func @transform_4(%arg0: i32, %arg1: i32) -> (i32, i32) {
    %c0_i32 = arith.constant 0 : i32
    %c0_i32_0 = arith.constant 0 : i32
    return %arg0, %c0_i32 : i32, i32
  }
}

</mosaic_0001>

<llo_original>
// kernel: tpu_custom_call.1
$region0: #{tpu_custom_call.1}
  #allocation0 [shape = 'u32[]', space=smem, size = 0x4, offset = 0x4, fixed_abs, tag = 'smem constant byte address 0x4 - core index']
  #allocation1 [shape = 'u32[144,128]{1,0:T(1,128)}', space=vmem, size = 0x12000, scoped, tag = 'internal scratch']
  #allocation2 [shape = 'f32[16,1]{1,0:T(8,128)}', space=vmem, size = 0x2000, scoped, tag = 'scratch operand']
  #allocation3 [shape = 'f32[16,1]{1,0:T(8,128)}', space=vmem, size = 0x2000, scoped, tag = 'scratch operand']
  %s0 = inlined_call_operand.vmem [shape: f32[16,32], index: 0, kind: input, shape index: {}]
  %s1 = inlined_call_operand.vmem [shape: f32[128,32], index: 1, kind: input, shape index: {}]
  %s2 = inlined_call_operand.vmem [shape: f32[1,128], index: 2, kind: input, shape index: {}]
  %s3 = inlined_call_operand.hbm [shape: f32[16,128], index: 3, kind: output, shape index: {0}]
  %s4 = inlined_call_operand.vmem [shape: f32[16,1], index: 4, kind: output, shape index: {1}]
  %5 = xla_tuple %s3, %s4
  %s6 = sld [smem:[#allocation0]]
  $region38: #{tpu_custom_call.1} parent=0
    _
  %s8 = ssub.s32 1, %s6
  %s9 = scalar_select 0, %s8, %s6
  $region1: #{tpu_custom_call.1} parent=0
    #allocation4 [shape = 'u8[8192]{0}', space=vmem, size = 0x2000, scoped, tag = 'output window, operand 0, single buffered']
    #allocation5 [shape = 's32[1]{0}', space=sflag, size = 0x4, scoped, tag = 'scoped memory for tpu_custom_call.1']
    %10 = vsyncpa [#allocation5], 0
    // Predicated region
    $region2: #{tpu_custom_call.1} parent=1 // pred_check
      _
    $region3: #{tpu_custom_call.1} parent=1 // pred_check_branch
      %12 = sbr.rel (0) target = $region5
    $region4: #{tpu_custom_call.1} parent=1 // pred_region
      _
    $region5: #{tpu_custom_call.1} parent=1 // pred_fallthru
      _
    // Predicated region
    $region6: #{tpu_custom_call.1} parent=1 // pred_check
      _
    $region7: #{tpu_custom_call.1} parent=1 // pred_check_branch
      %14 = sbr.rel (0) target = $region9
    $region8: #{tpu_custom_call.1} parent=1 // pred_region
      _
    $region9: #{tpu_custom_call.1} parent=1 // pred_fallthru
      _
    // Predicated region
    $region10: #{tpu_custom_call.1} parent=1 // pred_check
      _
    $region11: #{tpu_custom_call.1} parent=1 // pred_check_branch
      %16 = sbr.rel (0) target = $region13
    $region12: #{tpu_custom_call.1} parent=1 // pred_region
      _
    $region13: #{tpu_custom_call.1} parent=1 // pred_fallthru
      _
    %p17 = scmp.eq.s32.totalorder 0, 0
    // Predicated region
    $region14: #{tpu_custom_call.1} parent=1 // pred_check
      %p18 = pneg %p17
    $region15: #{tpu_custom_call.1} parent=1 // pred_check_branch
      %20 = sbr.rel (%p18) target = $region17
    $region16: #{tpu_custom_call.1} parent=1 // pred_region
      %vm21 = vcmask 7168
      %22 = vst.msk [vmem:[#allocation2] sm:$0xff] %vm21, -inf
      %23 = vst.msk [vmem:[#allocation2 + $0x8] sm:$0xff] %vm21, -inf
      %24 = vst.msk [vmem:[#allocation3] sm:$0xff] %vm21, 0.0
      %25 = vst.msk [vmem:[#allocation3 + $0x8] sm:$0xff] %vm21, 0.0
    $region17: #{tpu_custom_call.1} parent=1 // pred_fallthru
      _
    %v26 = vld [vmem:[%s0] sm:$0xff]
    %v27 = vld [vmem:[%s0 + $0x8] sm:$0xff]
    %v28 = vld [vmem:[%s1] sm:$0xff]
    %v29 = vld [vmem:[%s1 + $0x8] sm:$0xff]
    %v30 = vld [vmem:[%s1 + $0x10] sm:$0xff]
    %v31 = vld [vmem:[%s1 + $0x18] sm:$0xff]
    %v32 = vld [vmem:[%s1 + $0x20] sm:$0xff]
    %v33 = vld [vmem:[%s1 + $0x28] sm:$0xff]
    %v34 = vld [vmem:[%s1 + $0x30] sm:$0xff]
    %v35 = vld [vmem:[%s1 + $0x38] sm:$0xff]
    %v36 = vld [vmem:[%s1 + $0x40] sm:$0xff]
    %v37 = vld [vmem:[%s1 + $0x48] sm:$0xff]
    %v38 = vld [vmem:[%s1 + $0x50] sm:$0xff]
    %v39 = vld [vmem:[%s1 + $0x58] sm:$0xff]
    %v40 = vld [vmem:[%s1 + $0x60] sm:$0xff]
    %v41 = vld [vmem:[%s1 + $0x68] sm:$0xff]
    %v42 = vld [vmem:[%s1 + $0x70] sm:$0xff]
    %v43 = vld [vmem:[%s1 + $0x78] sm:$0xff]
    %v44 = vld [vmem:[%s2] sm:$0x1]
    %v46 = vlaneseq
    %v47 = vshrl.u32 %v46, 7
    %v48 = vsub.s32 0, %v47
    %v49 = vrot.slane %v44, %v48
    %vm51 = vcmask 261120
    %v53 = vsel %vm51, %v26, 0
    %v56 = vsel %vm51, %v27, 0
    %v59 = vsel %vm51, %v28, 0
    %v62 = vsel %vm51, %v29, 0
    %v65 = vsel %vm51, %v30, 0
    %v68 = vsel %vm51, %v31, 0
    %v71 = vsel %vm51, %v32, 0
    %v74 = vsel %vm51, %v33, 0
    %v77 = vsel %vm51, %v34, 0
    %v80 = vsel %vm51, %v35, 0
    %v83 = vsel %vm51, %v36, 0
    %v86 = vsel %vm51, %v37, 0
    %v89 = vsel %vm51, %v38, 0
    %v92 = vsel %vm51, %v39, 0
    %v95 = vsel %vm51, %v40, 0
    %v98 = vsel %vm51, %v41, 0
    %v101 = vsel %vm51, %v42, 0
    %v104 = vsel %vm51, %v43, 0
    %106 = vmatprep.subr.mxu0 0.0
    %107 = vmatpush1.xpose.msra.mxu0 %v59
    %108 = vmatprep.subr.mxu0 0.0
    %109 = vmatpush1.xpose.msra.mxu0 %v62
    %110 = vmatprep.subr.mxu0 0.0
    %111 = vmatpush1.xpose.msra.mxu0 %v65
    %112 = vmatprep.subr.mxu0 0.0
    %113 = vmatpush1.xpose.msra.mxu0 %v68
    %114 = vmatprep.subr.mxu0 0.0
    %115 = vmatpush1.xpose.msra.mxu0 %v71
    %116 = vmatprep.subr.mxu0 0.0
    %117 = vmatpush1.xpose.msra.mxu0 %v74
    %118 = vmatprep.subr.mxu0 0.0
    %119 = vmatpush1.xpose.msra.mxu0 %v77
    %120 = vmatprep.subr.mxu0 0.0
    %121 = vmatpush1.xpose.msra.mxu0 %v80
    %122 = vmatprep.subr.mxu0 0.0
    %123 = vmatpush1.xpose.msra.mxu0 %v83
    %124 = vmatprep.subr.mxu0 0.0
    %125 = vmatpush1.xpose.msra.mxu0 %v86
    %126 = vmatprep.subr.mxu0 0.0
    %127 = vmatpush1.xpose.msra.mxu0 %v89
    %128 = vmatprep.subr.mxu0 0.0
    %129 = vmatpush1.xpose.msra.mxu0 %v92
    %130 = vmatprep.subr.mxu0 0.0
    %131 = vmatpush1.xpose.msra.mxu0 %v95
    %132 = vmatprep.subr.mxu0 0.0
    %133 = vmatpush1.xpose.msra.mxu0 %v98
    %134 = vmatprep.subr.mxu0 0.0
    %135 = vmatpush1.xpose.msra.mxu0 %v101
    %136 = vmatprep.subr.mxu0 0.0
    %137 = vmatpush1.xpose.msra.mxu0 %v104
    %138 = vmatprep.subr.mxu0 0.0
    %139 = vmatpush1.xpose.msra.mxu0 0.0
    %140 = vmatprep.subr.mxu0 0.0
    %141 = vmatpush1.xpose.msra.mxu0 0.0
    %142 = vmatprep.subr.mxu0 0.0
    %143 = vmatpush1.xpose.msra.mxu0 0.0
    %144 = vmatprep.subr.mxu0 0.0
    %145 = vmatpush1.xpose.msra.mxu0 0.0
    %146 = vmatprep.subr.mxu0 0.0
    %147 = vmatpush1.xpose.msra.mxu0 0.0
    %148 = vmatprep.subr.mxu0 0.0
    %149 = vmatpush1.xpose.msra.mxu0 0.0
    %150 = vmatprep.subr.mxu0 0.0
    %151 = vmatpush1.xpose.msra.mxu0 0.0
    %152 = vmatprep.subr.mxu0 0.0
    %153 = vmatpush1.xpose.msra.mxu0 0.0
    %154 = vmatprep.subr.mxu0 0.0
    %155 = vmatpush1.xpose.msra.mxu0 0.0
    %156 = vmatprep.subr.mxu0 0.0
    %157 = vmatpush1.xpose.msra.mxu0 0.0
    %158 = vmatprep.subr.mxu0 0.0
    %159 = vmatpush1.xpose.msra.mxu0 0.0
    %160 = vmatprep.subr.mxu0 0.0
    %161 = vmatpush1.xpose.msra.mxu0 0.0
    %162 = vmatprep.subr.mxu0 0.0
    %163 = vmatpush1.xpose.msra.mxu0 0.0
    %164 = vmatprep.subr.mxu0 0.0
    %165 = vmatpush1.xpose.msra.mxu0 0.0
    %166 = vmatprep.subr.mxu0 0.0
    %167 = vmatpush1.xpose.msra.mxu0 0.0
    %168 = vmatprep.subr.mxu0 0.0
    %169 = vmatpush1.xpose.msra.mxu0 0.0
    %170 = vmatprep.mubr.f32.mxu0 0.0
    %171 = vmatmul.mubr.f32.gmra.mrb[0].mxu0 %v53
    %v172 = vpop.f32.mrb[0].mxu0
    %v173 = vadd.f32 %v49, %v172
    %v174 = vpop.f32.mrb[0].mxu0
    %175 = vmatprep.mubr.f32.mxu0 0.0
    %176 = vmatmul.mubr.f32.gmra.mrb[0].mxu0 %v56
    %v177 = vpop.f32.mrb[0].mxu0
    %v178 = vadd.f32 %v49, %v177
    %v179 = vpop.f32.mrb[0].mxu0
    %180 = vdwg.mxu0
    %v181 = vld [vmem:[#allocation2] sm:$0xff]
    %v182 = vld [vmem:[#allocation2 + $0x8] sm:$0xff]
    %v183 = vld [vmem:[#allocation3] sm:$0xff]
    %v184 = vld [vmem:[#allocation3 + $0x8] sm:$0xff]
    %185 = vmax.xlane.f32.xlu0 %v173
    %v186 = vpop.xlane.xlu0 %185
    %187 = vmax.xlane.f32.xlu0 %v178
    %v188 = vpop.xlane.xlu0 %187
    %v189 = vmax.f32 %v181, %v186
    %v190 = vmax.f32 %v182, %v188
    %v191 = vsub.f32 %v181, %v189
    %v192 = vsub.f32 %v182, %v190
    %v193 = vmul.f32 %v191, 1.442695
    %v194 = vpow.pop %v193
    %v195 = vmul.f32 %v192, 1.442695
    %v196 = vpow.pop %v195
    %v197 = vmul.f32 %v183, %v194
    %v198 = vmul.f32 %v184, %v196
    %200 = vset.pattern.permute.xlu0 0
    %201 = vperm.xlu0 %200, %v189
    %v202 = vpop.permute.xlu0 %201
    %205 = vset.pattern.permute.xlu0 0
    %206 = vperm.xlu0 %205, %v190
    %v207 = vpop.permute.xlu0 %206
    %v209 = vsub.f32 %v173, %v202
    %v210 = vsub.f32 %v178, %v207
    %v211 = vmul.f32 %v209, 1.442695
    %v212 = vpow.pop %v211
    %v213 = vmul.f32 %v210, 1.442695
    %v214 = vpow.pop %v213
    %215 = vadd.xlane.f32.xlu0 %v212
    %v216 = vpop.xlane.xlu0 %215
    %217 = vadd.xlane.f32.xlu0 %v214
    %v218 = vpop.xlane.xlu0 %217
    %v219 = vadd.f32 %v197, %v216
    %v220 = vadd.f32 %v198, %v218
    %vm221 = vcmask 7168
    %222 = vst.msk [vmem:[#allocation2] sm:$0xff] %vm221, %v189
    %223 = vst.msk [vmem:[#allocation2 + $0x8] sm:$0xff] %vm221, %v190
    %224 = vst.msk [vmem:[#allocation3] sm:$0xff] %vm221, %v219
    %225 = vst.msk [vmem:[#allocation3 + $0x8] sm:$0xff] %vm221, %v220
    %v226 = vlog2.pop %v219
    %v227 = vmul.f32 %v226, 0.6931472
    %v228 = vlog2.pop %v220
    %v229 = vmul.f32 %v228, 0.6931472
    %v230 = vadd.f32 %v189, %v227
    %v231 = vadd.f32 %v190, %v229
    %233 = vset.pattern.permute.xlu0 0
    %234 = vperm.xlu0 %233, %v230
    %v235 = vpop.permute.xlu0 %234
    %238 = vset.pattern.permute.xlu0 0
    %239 = vperm.xlu0 %238, %v231
    %v240 = vpop.permute.xlu0 %239
    %v242 = vsub.f32 %v173, %v235
    %v243 = vsub.f32 %v178, %v240
    %244 = vst [vmem:[#allocation4] sm:$0xff] %v242
    %245 = vst [vmem:[#allocation4 + $0x8] sm:$0xff] %v243
    // Predicated region
    $region18: #{tpu_custom_call.1} parent=1 // pred_check
      %p246 = pneg %p17
    $region19: #{tpu_custom_call.1} parent=1 // pred_check_branch
      %248 = sbr.rel (%p246) target = $region21
    $region20: #{tpu_custom_call.1} parent=1 // pred_region
      %v249 = vld [vmem:[#allocation2] sm:$0xff]
      %v250 = vld [vmem:[#allocation2 + $0x8] sm:$0xff]
      %v251 = vld [vmem:[#allocation3] sm:$0xff]
      %v252 = vld [vmem:[#allocation3 + $0x8] sm:$0xff]
      %v253 = vlog2.pop %v251
      %v254 = vmul.f32 %v253, 0.6931472
      %v255 = vlog2.pop %v252
      %v256 = vmul.f32 %v255, 0.6931472
      %v257 = vadd.f32 %v249, %v254
      %v258 = vadd.f32 %v250, %v256
      %259 = vst.msk [vmem:[%s4] sm:$0xff] %vm221, %v257
      %260 = vst.msk [vmem:[%s4 + $0x8] sm:$0xff] %vm221, %v258
    $region21: #{tpu_custom_call.1} parent=1 // pred_fallthru
      _
    // Predicated region
    $region22: #{tpu_custom_call.1} parent=1 // pred_check
      _
    $region23: #{tpu_custom_call.1} parent=1 // pred_check_branch
      %262 = sbr.rel (0) target = $region25
    $region24: #{tpu_custom_call.1} parent=1 // pred_region
      %s264 = ssub.s32 256, 256
      %265 = vsyncadd [#allocation5], %s264
      %s266 = sshll.u32 [#allocation4], 4
      %s267 = int_to_ptr.vmem [resolvable:$true] %s266
      %272 = dma.vmem_to_hbm [thread:$0]  %s267, 256, %s3, [#allocation5], 128, 128, 8
    $region25: #{tpu_custom_call.1} parent=1 // pred_fallthru
      _
    // Predicated region
    $region26: #{tpu_custom_call.1} parent=1 // pred_check
      _
    $region27: #{tpu_custom_call.1} parent=1 // pred_check_branch
      %274 = sbr.rel (0) target = $region29
    $region28: #{tpu_custom_call.1} parent=1 // pred_region
      _
    $region29: #{tpu_custom_call.1} parent=1 // pred_fallthru
      _
    // Predicated region
    $region30: #{tpu_custom_call.1} parent=1 // pred_check
      _
    $region31: #{tpu_custom_call.1} parent=1 // pred_check_branch
      %276 = sbr.rel (0) target = $region33
    $region32: #{tpu_custom_call.1} parent=1 // pred_region
      %277 = dma.done [#allocation5], 256
    $region33: #{tpu_custom_call.1} parent=1 // pred_fallthru
      _
    // Predicated region
    $region34: #{tpu_custom_call.1} parent=1 // pred_check
      _
    $region35: #{tpu_custom_call.1} parent=1 // pred_check_branch
      %279 = sbr.rel (0) target = $region37
    $region36: #{tpu_custom_call.1} parent=1 // pred_region
      _
    $region37: #{tpu_custom_call.1} parent=1 // pred_fallthru
      _
    %280 = vsyncpa [#allocation5], 1

</llo_original>
